<compile_context>
chip_gen: v7x
topology: tpu7x:2x2x1
jax: 0.10.0
libtpu: 0.0.40
codegen_flags: <defaults>
</compile_context>

<pallas_src>
import functools

import jax
import jax.numpy as jnp
from jax import lax
from jax.experimental import pallas as pl
from jax.experimental.pallas import tpu as pltpu


# ----------------------------- Pallas kernel --------------------------------

def dilated_layer_kernel(xp_ref, xc_ref, xn_ref, w5_ref, wgf_ref, wproj_ref,
                         b_ref, out_ref, y_ref, *, dilation, compute_dtype):
    C = xc_ref.shape[1]
    Tt = xc_ref.shape[2]
    E = 1                      # extra y columns needed by the k=3 gate/filter convs
    H = dilation + E           # x halo on each side of the extended window
    W = Tt + 2 * E             # extended stage-1 output width

    t = pl.program_id(1)
    is_first = t == 0
    is_last = t == pl.num_programs(1) - 1

    xc = xc_ref[0]             # (C, Tt) original dtype (f32)
    cd = compute_dtype

    # ---- x with halos: xpad[:, j] == x_global[:, tile_start - H + j] --------
    if H <= Tt:
        xp = xp_ref[0]
        xn = xn_ref[0]
        left = jnp.where(is_first, 0.0, xp[:, Tt - H:])     # (C, H)
        right = jnp.where(is_last, 0.0, xn[:, :H])          # (C, H)
    else:
        # Wrapper guarantees single-tile mode here -> halo is pure zero padding.
        left = jnp.zeros((C, H), xc.dtype)
        right = jnp.zeros((C, H), xc.dtype)
    xpad = jnp.concatenate([left, xc, right], axis=1).astype(cd)   # (C, Tt+2H)

    # ---- stage 1: dil_conv + local_conv + direct_conv as ONE matmul ---------
    # Tap order must match the fused weight layout in the wrapper.
    offs = (-dilation, -1, 0, 1, dilation)
    x5 = jnp.concatenate(
        [xpad[:, H - E + o: H - E + o + W] for o in offs], axis=0)  # (5C, W)
    b_all = b_ref[...]                                              # (4C, 1) f32
    y1 = jnp.dot(w5_ref[...], x5, preferred_element_type=jnp.float32)
    y1 = y1 + b_all[0:C, :]                                         # (C, W) f32

    # Columns of the extended window that fall outside [0, T) must be zero
    # (the gate/filter Conv1d zero-pads y, it does not extrapolate it).
    col = lax.broadcasted_iota(jnp.int32, (1, W), 1)
    outside = (is_first & (col < E)) | (is_last & (col >= Tt + E))
    y1 = jnp.where(outside, 0.0, y1)

    # ---- stage 2: gate_conv + filter_conv as ONE matmul ---------------------
    y1c = y1.astype(cd)
    y3 = jnp.concatenate(
        [y1c[:, E + o: E + o + Tt] for o in (-1, 0, 1)], axis=0)    # (3C, Tt)
    gf = jnp.dot(wgf_ref[...], y3, preferred_element_type=jnp.float32)
    gf = gf + b_all[C:3 * C, :]                                     # (2C, Tt)
    g = gf[:C, :]
    f = gf[C:, :]
    act = jax.nn.sigmoid(g) * jnp.tanh(f)                           # f32 (VPU/EUP)

    # ---- proj_conv (1x1) + residual -----------------------------------------
    yp = jnp.dot(wproj_ref[...], act.astype(cd),
                 preferred_element_type=jnp.float32) + b_all[3 * C:, :]

    out_ref[0] = (xc + yp).astype(out_ref.dtype)
    y_ref[0] = yp.astype(y_ref.dtype)


# ------------------------------- wrapper -------------------------------------

def _pick_t_tile(T, target):
    """Largest lane-aligned (multiple of 128) divisor of T that is <= target,
    else the whole sequence as a single tile."""
    if T <= target:
        return T
    tt = (target // 128) * 128
    while tt >= 128:
        if T % tt == 0:
            return tt
        tt -= 128
    return T


def _prep_weights(params, compute_dtype):
    """Fuse the PyTorch Conv1d weights into the three matmul operands."""
    # Stage 1: taps ordered [-dilation, -1, 0, +1, +dilation]; the three
    # zero-offset taps (dil k=1, local k=1, direct) are summed into one block.
    dil_w, loc_w, dir_w = params["dil_w"], params["loc_w"], params["dir_w"]
    w_center = dil_w[:, :, 1] + loc_w[:, :, 1] + dir_w[:, :, 0]
    w5 = jnp.concatenate(
        [dil_w[:, :, 0], loc_w[:, :, 0], w_center, loc_w[:, :, 2],
         dil_w[:, :, 2]], axis=1).astype(compute_dtype)              # (C, 5C)
    b1 = params["dil_b"] + params["loc_b"] + params["dir_b"]          # (C,)

    # Stage 2: gate and filter stacked on C_out, taps [-1, 0, +1] on C_in.
    gate_flat = jnp.concatenate([params["gate_w"][:, :, k] for k in range(3)],
                                axis=1)                               # (C, 3C)
    filt_flat = jnp.concatenate([params["filt_w"][:, :, k] for k in range(3)],
                                axis=1)                               # (C, 3C)
    wgf = jnp.concatenate([gate_flat, filt_flat], axis=0).astype(compute_dtype)
    bgf = jnp.concatenate([params["gate_b"], params["filt_b"]], axis=0)

    wproj = params["proj_w"][:, :, 0].astype(compute_dtype)           # (C, C)
    bproj = params["proj_b"]

    b_all = jnp.concatenate([b1, bgf, bproj], axis=0).astype(jnp.float32)
    b_all = b_all[:, None]                                            # (4C, 1)
    return w5, wgf, wproj, b_all


def dilated_layer_pallas(x, params, dilation, *, compute_dtype=jnp.bfloat16,
                         t_tile_target=1024):
    """x: (B, C, T).  Returns (x + y, y), each (B, C, T) — channel-major, no
    wrapper transposes."""
    B, C, T = x.shape
    t_tile = _pick_t_tile(T, t_tile_target)
    if dilation + 1 > t_tile:
        t_tile = T                       # fall back to a single tile per sequence
    nT = T // t_tile
    assert T % t_tile == 0

    w5, wgf, wproj, b_all = _prep_weights(params, compute_dtype)

    kernel = functools.partial(dilated_layer_kernel, dilation=dilation,
                               compute_dtype=compute_dtype)

    def full_spec(shape):
        n = len(shape)
        return pl.BlockSpec(shape, lambda b, t, _n=n: (0,) * _n)

    x_prev = pl.BlockSpec((1, C, t_tile),
                          lambda b, t: (b, 0, jnp.maximum(t - 1, 0)))
    x_cur = pl.BlockSpec((1, C, t_tile), lambda b, t: (b, 0, t))
    x_next = pl.BlockSpec((1, C, t_tile),
                          lambda b, t: (b, 0, jnp.minimum(t + 1, nT - 1)))
    o_spec = pl.BlockSpec((1, C, t_tile), lambda b, t: (b, 0, t))

    out, y = pl.pallas_call(
        kernel,
        out_shape=(jax.ShapeDtypeStruct((B, C, T), x.dtype),
                   jax.ShapeDtypeStruct((B, C, T), x.dtype)),
        grid_spec=pltpu.PrefetchScalarGridSpec(
            num_scalar_prefetch=0,
            grid=(B, nT),
            in_specs=[
                x_prev, x_cur, x_next,            # x (halo / current / halo)
                full_spec((C, 5 * C)),            # fused stage-1 weights
                full_spec((2 * C, 3 * C)),        # fused gate+filter weights
                full_spec((C, C)),                # proj weights
                full_spec((4 * C, 1)),            # fused biases (f32)
            ],
            out_specs=[o_spec, o_spec],
        ),
        compiler_params=pltpu.CompilerParams(
            dimension_semantics=("parallel", "parallel")),
    )(x, x, x, w5, wgf, wproj, b_all)

    return out, y


# ---------------- pure-JAX reference (mirrors torch.nn.Conv1d) ---------------

def _conv1d_ref(x, w, b, pad, dil):
    out = lax.conv_general_dilated(
        x, w, window_strides=(1,), padding=[(pad, pad)],
        rhs_dilation=(dil,), dimension_numbers=("NCH", "OIH", "NCH"))
    return out + b[None, :, None]


def dilated_layer_ref(x, p, dilation):
    y = (_conv1d_ref(x, p["dil_w"], p["dil_b"], dilation, dilation)
         + _conv1d_ref(x, p["loc_w"], p["loc_b"], 1, 1)
         + _conv1d_ref(x, p["dir_w"], p["dir_b"], 0, 1))
    g = _conv1d_ref(y, p["gate_w"], p["gate_b"], 1, 1)
    f = _conv1d_ref(y, p["filt_w"], p["filt_b"], 1, 1)
    y = jax.nn.sigmoid(g) * jnp.tanh(f)
    y = _conv1d_ref(y, p["proj_w"], p["proj_b"], 0, 1)
    return x + y, y


# -----------------------------------------------------------------------------

if __name__ == "__main__":
    B, C, T = 2, 32, 256         # batch, hidden, time
    dilation = 2

    key = jax.random.PRNGKey(0)
    ks = jax.random.split(key, 13)
    scale = 0.1
    params = {
        "dil_w":  scale * jax.random.normal(ks[0], (C, C, 3), jnp.float32),
        "dil_b":  scale * jax.random.normal(ks[1], (C,), jnp.float32),
        "loc_w":  scale * jax.random.normal(ks[2], (C, C, 3), jnp.float32),
        "loc_b":  scale * jax.random.normal(ks[3], (C,), jnp.float32),
        "dir_w":  scale * jax.random.normal(ks[4], (C, C, 1), jnp.float32),
        "dir_b":  scale * jax.random.normal(ks[5], (C,), jnp.float32),
        "gate_w": scale * jax.random.normal(ks[6], (C, C, 3), jnp.float32),
        "gate_b": scale * jax.random.normal(ks[7], (C,), jnp.float32),
        "filt_w": scale * jax.random.normal(ks[8], (C, C, 3), jnp.float32),
        "filt_b": scale * jax.random.normal(ks[9], (C,), jnp.float32),
        "proj_w": scale * jax.random.normal(ks[10], (C, C, 1), jnp.float32),
        "proj_b": scale * jax.random.normal(ks[11], (C,), jnp.float32),
    }
    x = jax.random.normal(ks[12], (B, C, T), jnp.float32)

    # Use a small time-tile target so the multi-tile (halo) path is exercised.
    out, y = dilated_layer_pallas(x, params, dilation, t_tile_target=128)
    out = jax.block_until_ready(out)
    y = jax.block_until_ready(y)

    out_ref, y_ref = dilated_layer_ref(x, params, dilation)
    assert out.shape == (B, C, T) and y.shape == (B, C, T)
    # bf16 matmul operands with f32 accumulation -> loosened tolerance.
    assert jnp.allclose(out, out_ref, atol=5e-2, rtol=5e-2)
    assert jnp.allclose(y, y_ref, atol=5e-2, rtol=5e-2)

    print("KERNEL_OK")
</pallas_src>

<mosaic_0001>
module attributes {stable_mosaic.version = 11 : i64} {
  func.func @dilated_layer_kernel(%arg0: i32, %arg1: i32, %arg2: memref<1x32x128xf32, #tpu.memory_space<vmem>>, %arg3: memref<1x32x128xf32, #tpu.memory_space<vmem>>, %arg4: memref<1x32x128xf32, #tpu.memory_space<vmem>>, %arg5: memref<32x160xbf16, #tpu.memory_space<vmem>>, %arg6: memref<64x96xbf16, #tpu.memory_space<vmem>>, %arg7: memref<32x32xbf16, #tpu.memory_space<vmem>>, %arg8: memref<128x1xf32, #tpu.memory_space<vmem>>, %arg9: memref<1x32x128xf32, #tpu.memory_space<vmem>>, %arg10: memref<1x32x128xf32, #tpu.memory_space<vmem>>) attributes {dimension_semantics = [#tpu.dimension_semantics<parallel>, #tpu.dimension_semantics<parallel>], iteration_bounds = array<i64: 2, 2>, scalar_prefetch = 0 : i64, scratch_operands = 0 : i64, tpu.core_type = #tpu.core_type<tc>, window_params = [{transform_indices = @transform_0, window_bounds = array<i64: 1, 32, 128>}, {transform_indices = @transform_1, window_bounds = array<i64: 1, 32, 128>}, {transform_indices = @transform_2, window_bounds = array<i64: 1, 32, 128>}, {pipeline_mode = #tpu.pipeline_mode<synchronous>, transform_indices = @transform_3, window_bounds = array<i64: 32, 160>}, {pipeline_mode = #tpu.pipeline_mode<synchronous>, transform_indices = @transform_4, window_bounds = array<i64: 64, 96>}, {pipeline_mode = #tpu.pipeline_mode<synchronous>, transform_indices = @transform_5, window_bounds = array<i64: 32, 32>}, {pipeline_mode = #tpu.pipeline_mode<synchronous>, transform_indices = @transform_6, window_bounds = array<i64: 128, 1>}, {transform_indices = @transform_7, window_bounds = array<i64: 1, 32, 128>}, {transform_indices = @transform_8, window_bounds = array<i64: 1, 32, 128>}]} {
    %c0_i32 = arith.constant 0 : i32
    %0 = arith.cmpi eq, %arg1, %c0_i32 : i32
    %c1_i32 = arith.constant 1 : i32
    %1 = arith.cmpi eq, %arg1, %c1_i32 : i32
    %c0 = arith.constant 0 : index
    %c0_0 = arith.constant 0 : index
    %c0_1 = arith.constant 0 : index
    %2 = vector.load %arg3[%c0, %c0_0, %c0_1] : memref<1x32x128xf32, #tpu.memory_space<vmem>>, vector<1x32x128xf32>
    %3 = vector.shape_cast %2 : vector<1x32x128xf32> to vector<32x128xf32>
    %c0_2 = arith.constant 0 : index
    %c0_3 = arith.constant 0 : index
    %c0_4 = arith.constant 0 : index
    %4 = vector.load %arg2[%c0_2, %c0_3, %c0_4] : memref<1x32x128xf32, #tpu.memory_space<vmem>>, vector<1x32x128xf32>
    %5 = vector.shape_cast %4 : vector<1x32x128xf32> to vector<32x128xf32>
    %c0_5 = arith.constant 0 : index
    %c0_6 = arith.constant 0 : index
    %c0_7 = arith.constant 0 : index
    %6 = vector.load %arg4[%c0_5, %c0_6, %c0_7] : memref<1x32x128xf32, #tpu.memory_space<vmem>>, vector<1x32x128xf32>
    %7 = vector.shape_cast %6 : vector<1x32x128xf32> to vector<32x128xf32>
    %8 = vector.extract_strided_slice %5 {offsets = [0, 125], sizes = [32, 3], strides = [1, 1]} : vector<32x128xf32> to vector<32x3xf32>
    %cst = arith.constant 0.000000e+00 : f32
    %9 = vector.broadcast %cst : f32 to vector<32x3xf32>
    %10 = arith.select %0, %9, %8 : vector<32x3xf32>
    %11 = vector.extract_strided_slice %7 {offsets = [0, 0], sizes = [32, 3], strides = [1, 1]} : vector<32x128xf32> to vector<32x3xf32>
    %cst_8 = arith.constant 0.000000e+00 : f32
    %12 = vector.broadcast %cst_8 : f32 to vector<32x3xf32>
    %13 = arith.select %1, %12, %11 : vector<32x3xf32>
    %14 = tpu.concatenate %10, %3, %13 in 1 : vector<32x3xf32>, vector<32x128xf32>, vector<32x3xf32> -> vector<32x134xf32>
    %15 = arith.truncf %14 : vector<32x134xf32> to vector<32x134xbf16>
    %16 = vector.extract_strided_slice %15 {offsets = [0, 0], sizes = [32, 130], strides = [1, 1]} : vector<32x134xbf16> to vector<32x130xbf16>
    %17 = vector.extract_strided_slice %15 {offsets = [0, 1], sizes = [32, 130], strides = [1, 1]} : vector<32x134xbf16> to vector<32x130xbf16>
    %18 = vector.extract_strided_slice %15 {offsets = [0, 2], sizes = [32, 130], strides = [1, 1]} : vector<32x134xbf16> to vector<32x130xbf16>
    %19 = vector.extract_strided_slice %15 {offsets = [0, 3], sizes = [32, 130], strides = [1, 1]} : vector<32x134xbf16> to vector<32x130xbf16>
    %20 = vector.extract_strided_slice %15 {offsets = [0, 4], sizes = [32, 130], strides = [1, 1]} : vector<32x134xbf16> to vector<32x130xbf16>
    %21 = tpu.concatenate %16, %17, %18, %19, %20 in 0 : vector<32x130xbf16>, vector<32x130xbf16>, vector<32x130xbf16>, vector<32x130xbf16>, vector<32x130xbf16> -> vector<160x130xbf16>
    %c0_9 = arith.constant 0 : index
    %c0_10 = arith.constant 0 : index
    %22 = vector.load %arg8[%c0_9, %c0_10] : memref<128x1xf32, #tpu.memory_space<vmem>>, vector<128x1xf32>
    %c0_11 = arith.constant 0 : index
    %c0_12 = arith.constant 0 : index
    %23 = vector.load %arg5[%c0_11, %c0_12] : memref<32x160xbf16, #tpu.memory_space<vmem>>, vector<32x160xbf16>
    %cst_13 = arith.constant dense<0.000000e+00> : vector<32x130xf32>
    %24 = tpu.matmul %23, %21, %cst_13 {dimension_numbers = #tpu.dot_dimension_numbers<[1], [0], [0], [1], [0, 0, 1, 1], [], []>} : vector<32x160xbf16>, vector<160x130xbf16>, vector<32x130xf32> -> vector<32x130xf32>
    %25 = vector.extract_strided_slice %22 {offsets = [0, 0], sizes = [32, 1], strides = [1, 1]} : vector<128x1xf32> to vector<32x1xf32>
    %26 = vector.broadcast %25 : vector<32x1xf32> to vector<32x130xf32>
    %27 = arith.addf %24, %26 : vector<32x130xf32>
    %28 = tpu.iota {dimensions = array<i32: 1>} : vector<1x130xi32>
    %c1_i32_14 = arith.constant 1 : i32
    %29 = vector.broadcast %c1_i32_14 : i32 to vector<1x130xi32>
    %30 = arith.cmpi slt, %28, %29 : vector<1x130xi32>
    %31 = vector.broadcast %0 : i1 to vector<1x130xi1>
    %32 = arith.andi %31, %30 : vector<1x130xi1>
    %c129_i32 = arith.constant 129 : i32
    %33 = vector.broadcast %c129_i32 : i32 to vector<1x130xi32>
    %34 = arith.cmpi sge, %28, %33 : vector<1x130xi32>
    %35 = vector.broadcast %1 : i1 to vector<1x130xi1>
    %36 = arith.andi %35, %34 : vector<1x130xi1>
    %37 = arith.ori %32, %36 : vector<1x130xi1>
    %cst_15 = arith.constant 0.000000e+00 : f32
    %38 = vector.shape_cast %37 : vector<1x130xi1> to vector<1x130xi1>
    %39 = vector.broadcast %38 : vector<1x130xi1> to vector<32x130xi1>
    %40 = vector.broadcast %cst_15 : f32 to vector<32x130xf32>
    %41 = arith.select %39, %40, %27 : vector<32x130xi1>, vector<32x130xf32>
    %42 = arith.truncf %41 : vector<32x130xf32> to vector<32x130xbf16>
    %43 = vector.extract_strided_slice %42 {offsets = [0, 0], sizes = [32, 128], strides = [1, 1]} : vector<32x130xbf16> to vector<32x128xbf16>
    %44 = vector.extract_strided_slice %42 {offsets = [0, 1], sizes = [32, 128], strides = [1, 1]} : vector<32x130xbf16> to vector<32x128xbf16>
    %45 = vector.extract_strided_slice %42 {offsets = [0, 2], sizes = [32, 128], strides = [1, 1]} : vector<32x130xbf16> to vector<32x128xbf16>
    %46 = tpu.concatenate %43, %44, %45 in 0 : vector<32x128xbf16>, vector<32x128xbf16>, vector<32x128xbf16> -> vector<96x128xbf16>
    %c0_16 = arith.constant 0 : index
    %c0_17 = arith.constant 0 : index
    %47 = vector.load %arg6[%c0_16, %c0_17] : memref<64x96xbf16, #tpu.memory_space<vmem>>, vector<64x96xbf16>
    %cst_18 = arith.constant dense<0.000000e+00> : vector<64x128xf32>
    %48 = tpu.matmul %47, %46, %cst_18 {dimension_numbers = #tpu.dot_dimension_numbers<[1], [0], [0], [1], [0, 0, 1, 1], [], []>} : vector<64x96xbf16>, vector<96x128xbf16>, vector<64x128xf32> -> vector<64x128xf32>
    %49 = vector.extract_strided_slice %22 {offsets = [32, 0], sizes = [64, 1], strides = [1, 1]} : vector<128x1xf32> to vector<64x1xf32>
    %50 = vector.broadcast %49 : vector<64x1xf32> to vector<64x128xf32>
    %51 = arith.addf %48, %50 : vector<64x128xf32>
    %52 = vector.extract_strided_slice %51 {offsets = [0, 0], sizes = [32, 128], strides = [1, 1]} : vector<64x128xf32> to vector<32x128xf32>
    %53 = vector.extract_strided_slice %51 {offsets = [32, 0], sizes = [32, 128], strides = [1, 1]} : vector<64x128xf32> to vector<32x128xf32>
    %54 = arith.negf %52 : vector<32x128xf32>
    %55 = math.exp %54 : vector<32x128xf32>
    %cst_19 = arith.constant 1.000000e+00 : f32
    %56 = vector.broadcast %cst_19 : f32 to vector<32x128xf32>
    %57 = arith.addf %56, %55 : vector<32x128xf32>
    %58 = arith.divf %56, %57 : vector<32x128xf32>
    %59 = math.tanh %53 : vector<32x128xf32>
    %60 = arith.mulf %58, %59 : vector<32x128xf32>
    %c0_20 = arith.constant 0 : index
    %c0_21 = arith.constant 0 : index
    %61 = vector.load %arg7[%c0_20, %c0_21] : memref<32x32xbf16, #tpu.memory_space<vmem>>, vector<32x32xbf16>
    %62 = arith.truncf %60 : vector<32x128xf32> to vector<32x128xbf16>
    %cst_22 = arith.constant dense<0.000000e+00> : vector<32x128xf32>
    %63 = tpu.matmul %61, %62, %cst_22 {dimension_numbers = #tpu.dot_dimension_numbers<[1], [0], [0], [1], [0, 0, 1, 1], [], []>} : vector<32x32xbf16>, vector<32x128xbf16>, vector<32x128xf32> -> vector<32x128xf32>
    %64 = vector.extract_strided_slice %22 {offsets = [96, 0], sizes = [32, 1], strides = [1, 1]} : vector<128x1xf32> to vector<32x1xf32>
    %65 = vector.broadcast %64 : vector<32x1xf32> to vector<32x128xf32>
    %66 = arith.addf %63, %65 : vector<32x128xf32>
    %67 = arith.addf %3, %66 : vector<32x128xf32>
    %c0_23 = arith.constant 0 : index
    %c0_24 = arith.constant 0 : index
    %c0_25 = arith.constant 0 : index
    %68 = vector.load %arg9[%c0_23, %c0_24, %c0_25] : memref<1x32x128xf32, #tpu.memory_space<vmem>>, vector<1x32x128xf32>
    %69 = vector.shape_cast %68 : vector<1x32x128xf32> to vector<32x128xf32>
    %70 = vector.shape_cast %67 : vector<32x128xf32> to vector<1x32x128xf32>
    tpu.vector_store %arg9[%c0_23, %c0_24, %c0_25], %70 {strides = array<i32>} : memref<1x32x128xf32, #tpu.memory_space<vmem>>, vector<1x32x128xf32>,
    %c0_26 = arith.constant 0 : index
    %c0_27 = arith.constant 0 : index
    %c0_28 = arith.constant 0 : index
    %71 = vector.load %arg10[%c0_26, %c0_27, %c0_28] : memref<1x32x128xf32, #tpu.memory_space<vmem>>, vector<1x32x128xf32>
    %72 = vector.shape_cast %71 : vector<1x32x128xf32> to vector<32x128xf32>
    %73 = vector.shape_cast %66 : vector<32x128xf32> to vector<1x32x128xf32>
    tpu.vector_store %arg10[%c0_26, %c0_27, %c0_28], %73 {strides = array<i32>} : memref<1x32x128xf32, #tpu.memory_space<vmem>>, vector<1x32x128xf32>,
    return
  }
  func.func @transform_0(%arg0: i32, %arg1: i32) -> (i32, i32, i32) {
    %c1_i32 = arith.constant 1 : i32
    %0 = arith.subi %arg1, %c1_i32 : i32
    %c0_i32 = arith.constant 0 : i32
    %1 = arith.maxsi %0, %c0_i32 : i32
    %c0_i32_0 = arith.constant 0 : i32
    %c0_i32_1 = arith.constant 0 : i32
    return %arg0, %c0_i32_0, %1 : i32, i32, i32
  }
  func.func @transform_1(%arg0: i32, %arg1: i32) -> (i32, i32, i32) {
    %c0_i32 = arith.constant 0 : i32
    %c0_i32_0 = arith.constant 0 : i32
    return %arg0, %c0_i32, %arg1 : i32, i32, i32
  }
  func.func @transform_2(%arg0: i32, %arg1: i32) -> (i32, i32, i32) {
    %c1_i32 = arith.constant 1 : i32
    %0 = arith.addi %arg1, %c1_i32 : i32
    %c1_i32_0 = arith.constant 1 : i32
    %1 = arith.minsi %0, %c1_i32_0 : i32
    %c0_i32 = arith.constant 0 : i32
    %c0_i32_1 = arith.constant 0 : i32
    return %arg0, %c0_i32, %1 : i32, i32, i32
  }
  func.func @transform_3(%arg0: i32, %arg1: i32) -> (i32, i32) {
    %c0_i32 = arith.constant 0 : i32
    %c0_i32_0 = arith.constant 0 : i32
    %c0_i32_1 = arith.constant 0 : i32
    return %c0_i32, %c0_i32_0 : i32, i32
  }
  func.func @transform_4(%arg0: i32, %arg1: i32) -> (i32, i32) {
    %c0_i32 = arith.constant 0 : i32
    %c0_i32_0 = arith.constant 0 : i32
    %c0_i32_1 = arith.constant 0 : i32
    return %c0_i32, %c0_i32_0 : i32, i32
  }
  func.func @transform_5(%arg0: i32, %arg1: i32) -> (i32, i32) {
    %c0_i32 = arith.constant 0 : i32
    %c0_i32_0 = arith.constant 0 : i32
    %c0_i32_1 = arith.constant 0 : i32
    return %c0_i32, %c0_i32_0 : i32, i32
  }
  func.func @transform_6(%arg0: i32, %arg1: i32) -> (i32, i32) {
    %c0_i32 = arith.constant 0 : i32
    %c0_i32_0 = arith.constant 0 : i32
    %c0_i32_1 = arith.constant 0 : i32
    return %c0_i32, %c0_i32_0 : i32, i32
  }
  func.func @transform_7(%arg0: i32, %arg1: i32) -> (i32, i32, i32) {
    %c0_i32 = arith.constant 0 : i32
    %c0_i32_0 = arith.constant 0 : i32
    return %arg0, %c0_i32, %arg1 : i32, i32, i32
  }
  func.func @transform_8(%arg0: i32, %arg1: i32) -> (i32, i32, i32) {
    %c0_i32 = arith.constant 0 : i32
    %c0_i32_0 = arith.constant 0 : i32
    return %arg0, %c0_i32, %arg1 : i32, i32, i32
  }
}

</mosaic_0001>

<llo_original>
// kernel: tpu_custom_call.1
$region0: #{tpu_custom_call.1}
  #allocation0 [shape = 'u32[]', space=smem, size = 0x4, offset = 0x4, fixed_abs, tag = 'smem constant byte address 0x4 - core index']
  #allocation1 [shape = 'u32[144,128]{1,0:T(1,128)}', space=vmem, size = 0x12000, scoped, tag = 'internal scratch']
  %s0 = inlined_call_operand.vmem [shape: f32[2,32,256], index: 0, kind: input, shape index: {}]
  %s1 = inlined_call_operand.hbm [shape: f32[2,32,256], index: 1, kind: input, shape index: {}]
  %s2 = inlined_call_operand.hbm [shape: f32[2,32,256], index: 2, kind: input, shape index: {}]
  %s3 = inlined_call_operand.hbm [shape: bf16[32,160], index: 3, kind: input, shape index: {}]
  %s4 = inlined_call_operand.hbm [shape: bf16[64,96], index: 4, kind: input, shape index: {}]
  %s5 = inlined_call_operand.vmem [shape: bf16[32,32], index: 5, kind: input, shape index: {}]
  %s6 = inlined_call_operand.vmem [shape: f32[128,1], index: 6, kind: input, shape index: {}]
  %s7 = inlined_call_operand.hbm [shape: f32[2,32,256], index: 7, kind: output, shape index: {0}]
  %s8 = inlined_call_operand.hbm [shape: f32[2,32,256], index: 8, kind: output, shape index: {1}]
  %9 = xla_tuple %s7, %s8
  %s10 = sld [smem:[#allocation0]]
  $region123: #{tpu_custom_call.1} parent=0
    _
  %s12 = ssub.s32 1, %s10
  %s13 = scalar_select 0, %s12, %s10
  $region1: #{tpu_custom_call.1} parent=0
    #allocation2 [shape = 'u8[32768]{0}', space=vmem, size = 0x8000, scoped, tag = 'input window, operand 0']
    #allocation3 [shape = 'u8[32768]{0}', space=vmem, size = 0x8000, scoped, tag = 'input window, operand 1']
    #allocation4 [shape = 's32[2]{0}', space=sflag, size = 0x8, scoped, tag = 'scoped memory for tpu_custom_call.1']
    #allocation5 [shape = 's32[2]{0}', space=sflag, size = 0x8, scoped, tag = 'scoped memory for tpu_custom_call.1']
    #allocation6 [shape = 'u8[32768]{0}', space=vmem, size = 0x8000, scoped, tag = 'input window, operand 2']
    #allocation7 [shape = 's32[2]{0}', space=sflag, size = 0x8, scoped, tag = 'scoped memory for tpu_custom_call.1']
    #allocation8 [shape = 'u8[16384]{0}', space=vmem, size = 0x4000, scoped, tag = 'input window, operand 3, single buffered']
    #allocation9 [shape = 'u8[16384]{0}', space=vmem, size = 0x4000, scoped, tag = 'input window, operand 4, single buffered']
    #allocation10 [shape = 's32[1]{0}', space=sflag, size = 0x4, scoped, tag = 'scoped memory for tpu_custom_call.1']
    #allocation11 [shape = 'u8[32768]{0}', space=vmem, size = 0x8000, scoped, tag = 'output window, operand 0']
    #allocation12 [shape = 'u8[32768]{0}', space=vmem, size = 0x8000, scoped, tag = 'output window, operand 1']
    #allocation13 [shape = 's32[2]{0}', space=sflag, size = 0x8, scoped, tag = 'scoped memory for tpu_custom_call.1']
    %14 = vsyncpa [#allocation4], 0
    %s15 = scalar_lea.sflag [#allocation4], 1
    %16 = vsyncpa %s15, 0
    %17 = vsyncpa [#allocation7], 0
    %s18 = scalar_lea.sflag [#allocation7], 1
    %19 = vsyncpa %s18, 0
    %20 = vsyncpa [#allocation10], 0
    %21 = vsyncpa [#allocation5], 0
    %s22 = scalar_lea.sflag [#allocation5], 1
    %23 = vsyncpa %s22, 0
    %24 = vsyncpa [#allocation13], 0
    %s25 = scalar_lea.sflag [#allocation13], 1
    %26 = vsyncpa %s25, 0
    loop: start=0, step=1, limit=6
    $region2: #{tpu_custom_call.1} parent=1 // loop_pre_header
      _
    $region3: #{tpu_custom_call.1} parent=1 // loop_header
      %s28 = sphi 0, %s32
      %p29 = scmp.ge.s32.totalorder %s28, 6
      %s35 = sphi 0, %s47
      %s36 = sphi 0, %s43
      %s37 = sphi 0, %s35
      %s38 = sphi 0, %s36
      %s39 = sphi 0, %s37
      %s40 = sphi 0, %s38
      %s58 = sphi 0, %s60
      %s61 = sphi 0, %s58
      %s62 = sphi 0, %s61
      %s78 = sphi 0, %s62
      %s86 = sphi 0, %s88
      %s89 = sphi 0, %s86
      %s90 = sphi 0, %s89
      %s106 = sphi 0, %s90
      %s120 = sphi 0, %s122
      %s123 = sphi 0, %s120
      %s124 = sphi 0, %s123
      %s140 = sphi 0, %s124
      %s144 = sphi 0, %s144
      %s146 = sphi 0, %s144
      %s147 = sphi 0, %s146
      %s161 = sphi 0, %s147
      %s165 = sphi 0, %s165
      %s167 = sphi 0, %s165
      %s168 = sphi 0, %s167
      %s182 = sphi 0, %s168
      %s186 = sphi 0, %s186
      %s188 = sphi 0, %s186
      %s189 = sphi 0, %s188
      %s203 = sphi 0, %s189
      %s207 = sphi 0, %s207
      %s209 = sphi 0, %s207
      %s210 = sphi 0, %s209
      %s224 = sphi 0, %s210
      %s232 = sphi 0, %s234
      %s235 = sphi 0, %s232
      %s236 = sphi 0, %s235
      %s252 = sphi 0, %s236
      %s260 = sphi 0, %s262
      %s263 = sphi 0, %s260
      %s264 = sphi 0, %s263
      %s280 = sphi 0, %s264
    $region4: #{tpu_custom_call.1} parent=1 // loop_header_branch
      %31 = sbr.rel (%p29) target = $region8
    $region5: #{tpu_custom_call.1} parent=1 // loop_body
      %s33 = ssub.s32 %s28, 1
      %s34 = ssub.s32 %s28, 2
      %s41 = sadd.s32 1, %s36
      %p42 = scmp.ge.s32.totalorder %s41, 2
      %s43 = scalar_select %p42, 0, %s41
      %s44 = sadd.s32 1, %s35
      %s45 = scalar_select %p42, %s44, %s35
      %p46 = scmp.ge.s32.totalorder %s45, 2
      %s47 = scalar_select %p46, 0, %s45
      %s48 = ssub.s32 %s36, 1
      %p49 = scmp.gt.s32.totalorder %s48, 0
      %s50 = scalar_select %p49, %s48, 0
      %s51 = ssub.s32 %s43, 1
      %p52 = scmp.gt.s32.totalorder %s51, 0
      %s53 = scalar_select %p52, %s51, 0
      %s54 = ssub.s32 %s35, %s47
      %s55 = ssub.s32 %s50, %s53
      %s56 = sor.u32 %s54, %s55
      %p57 = scmp.eq.s32.totalorder %s56, 0
      %s59 = sadd.s32 %s58, 1
      %s60 = scalar_select %p57, %s58, %s59
      %p63 = pneg %p57
      %p64 = scmp.eq.s32.totalorder %s28, 3
      %p65 = por %p63, %p64
      %p66 = scmp.ne.s32.totalorder %s58, %s61
      %p67 = scmp.eq.s32.totalorder %s28, 0
      %p68 = por %p66, %p67
      %p69 = scmp.ne.s32.totalorder %s58, %s61
      %p70 = scmp.eq.s32.totalorder %s33, 3
      %p71 = por %p69, %p70
      %p72 = scmp.ne.s32.totalorder %s61, %s62
      %p73 = scmp.eq.s32.totalorder %s33, 0
      %p74 = por %p72, %p73
      %p75 = scmp.ne.s32.totalorder %s61, %s62
      %p76 = scmp.eq.s32.totalorder %s34, 3
      %p77 = por %p75, %p76
      %p79 = scmp.ne.s32.totalorder %s62, %s78
      %p80 = scmp.eq.s32.totalorder %s34, 0
      %p81 = por %p79, %p80
      %s82 = ssub.s32 %s35, %s47
      %s83 = ssub.s32 %s36, %s43
      %s84 = sor.u32 %s82, %s83
      %p85 = scmp.eq.s32.totalorder %s84, 0
      %s87 = sadd.s32 %s86, 1
      %s88 = scalar_select %p85, %s86, %s87
      %p91 = pneg %p85
      %p92 = scmp.eq.s32.totalorder %s28, 3
      %p93 = por %p91, %p92
      %p94 = scmp.ne.s32.totalorder %s86, %s89
      %p95 = scmp.eq.s32.totalorder %s28, 0
      %p96 = por %p94, %p95
      %p97 = scmp.ne.s32.totalorder %s86, %s89
      %p98 = scmp.eq.s32.totalorder %s33, 3
      %p99 = por %p97, %p98
      %p100 = scmp.ne.s32.totalorder %s89, %s90
      %p101 = scmp.eq.s32.totalorder %s33, 0
      %p102 = por %p100, %p101
      %p103 = scmp.ne.s32.totalorder %s89, %s90
      %p104 = scmp.eq.s32.totalorder %s34, 3
      %p105 = por %p103, %p104
      %p107 = scmp.ne.s32.totalorder %s90, %s106
      %p108 = scmp.eq.s32.totalorder %s34, 0
      %p109 = por %p107, %p108
      %s110 = sadd.s32 %s36, 1
      %p111 = scmp.lt.s32.totalorder %s110, 1
      %s112 = scalar_select %p111, %s110, 1
      %s113 = sadd.s32 %s43, 1
      %p114 = scmp.lt.s32.totalorder %s113, 1
      %s115 = scalar_select %p114, %s113, 1
      %s116 = ssub.s32 %s35, %s47
      %s117 = ssub.s32 %s112, %s115
      %s118 = sor.u32 %s116, %s117
      %p119 = scmp.eq.s32.totalorder %s118, 0
      %s121 = sadd.s32 %s120, 1
      %s122 = scalar_select %p119, %s120, %s121
      %p125 = pneg %p119
      %p126 = scmp.eq.s32.totalorder %s28, 3
      %p127 = por %p125, %p126
      %p128 = scmp.ne.s32.totalorder %s120, %s123
      %p129 = scmp.eq.s32.totalorder %s28, 0
      %p130 = por %p128, %p129
      %p131 = scmp.ne.s32.totalorder %s120, %s123
      %p132 = scmp.eq.s32.totalorder %s33, 3
      %p133 = por %p131, %p132
      %p134 = scmp.ne.s32.totalorder %s123, %s124
      %p135 = scmp.eq.s32.totalorder %s33, 0
      %p136 = por %p134, %p135
      %p137 = scmp.ne.s32.totalorder %s123, %s124
      %p138 = scmp.eq.s32.totalorder %s34, 3
      %p139 = por %p137, %p138
      %p141 = scmp.ne.s32.totalorder %s124, %s140
      %p142 = scmp.eq.s32.totalorder %s34, 0
      %p143 = por %p141, %p142
      %s145 = sadd.s32 %s144, 1
      %p148 = scmp.eq.s32.totalorder %s28, 3
      %p149 = scmp.ne.s32.totalorder %s144, %s146
      %p150 = scmp.eq.s32.totalorder %s28, 0
      %p151 = por %p149, %p150
      %p152 = scmp.ne.s32.totalorder %s144, %s146
      %p153 = scmp.eq.s32.totalorder %s33, 3
      %p154 = por %p152, %p153
      %p155 = scmp.ne.s32.totalorder %s146, %s147
      %p156 = scmp.eq.s32.totalorder %s33, 0
      %p157 = por %p155, %p156
      %p158 = scmp.ne.s32.totalorder %s146, %s147
      %p159 = scmp.eq.s32.totalorder %s34, 3
      %p160 = por %p158, %p159
      %p162 = scmp.ne.s32.totalorder %s147, %s161
      %p163 = scmp.eq.s32.totalorder %s34, 0
      %p164 = por %p162, %p163
      %s166 = sadd.s32 %s165, 1
      %p169 = scmp.eq.s32.totalorder %s28, 3
      %p170 = scmp.ne.s32.totalorder %s165, %s167
      %p171 = scmp.eq.s32.totalorder %s28, 0
      %p172 = por %p170, %p171
      %p173 = scmp.ne.s32.totalorder %s165, %s167
      %p174 = scmp.eq.s32.totalorder %s33, 3
      %p175 = por %p173, %p174
      %p176 = scmp.ne.s32.totalorder %s167, %s168
      %p177 = scmp.eq.s32.totalorder %s33, 0
      %p178 = por %p176, %p177
      %p179 = scmp.ne.s32.totalorder %s167, %s168
      %p180 = scmp.eq.s32.totalorder %s34, 3
      %p181 = por %p179, %p180
      %p183 = scmp.ne.s32.totalorder %s168, %s182
      %p184 = scmp.eq.s32.totalorder %s34, 0
      %p185 = por %p183, %p184
      %s187 = sadd.s32 %s186, 1
      %p190 = scmp.eq.s32.totalorder %s28, 3
      %p191 = scmp.ne.s32.totalorder %s186, %s188
      %p192 = scmp.eq.s32.totalorder %s28, 0
      %p193 = por %p191, %p192
      %p194 = scmp.ne.s32.totalorder %s186, %s188
      %p195 = scmp.eq.s32.totalorder %s33, 3
      %p196 = por %p194, %p195
      %p197 = scmp.ne.s32.totalorder %s188, %s189
      %p198 = scmp.eq.s32.totalorder %s33, 0
      %p199 = por %p197, %p198
      %p200 = scmp.ne.s32.totalorder %s188, %s189
      %p201 = scmp.eq.s32.totalorder %s34, 3
      %p202 = por %p200, %p201
      %p204 = scmp.ne.s32.totalorder %s189, %s203
      %p205 = scmp.eq.s32.totalorder %s34, 0
      %p206 = por %p204, %p205
      %s208 = sadd.s32 %s207, 1
      %p211 = scmp.eq.s32.totalorder %s28, 3
      %p212 = scmp.ne.s32.totalorder %s207, %s209
      %p213 = scmp.eq.s32.totalorder %s28, 0
      %p214 = por %p212, %p213
      %p215 = scmp.ne.s32.totalorder %s207, %s209
      %p216 = scmp.eq.s32.totalorder %s33, 3
      %p217 = por %p215, %p216
      %p218 = scmp.ne.s32.totalorder %s209, %s210
      %p219 = scmp.eq.s32.totalorder %s33, 0
      %p220 = por %p218, %p219
      %p221 = scmp.ne.s32.totalorder %s209, %s210
      %p222 = scmp.eq.s32.totalorder %s34, 3
      %p223 = por %p221, %p222
      %p225 = scmp.ne.s32.totalorder %s210, %s224
      %p226 = scmp.eq.s32.totalorder %s34, 0
      %p227 = por %p225, %p226
      %s228 = ssub.s32 %s35, %s47
      %s229 = ssub.s32 %s36, %s43
      %s230 = sor.u32 %s228, %s229
      %p231 = scmp.eq.s32.totalorder %s230, 0
      %s233 = sadd.s32 %s232, 1
      %s234 = scalar_select %p231, %s232, %s233
      %p237 = pneg %p231
      %p238 = scmp.eq.s32.totalorder %s28, 3
      %p239 = por %p237, %p238
      %p240 = scmp.ne.s32.totalorder %s232, %s235
      %p241 = scmp.eq.s32.totalorder %s28, 0
      %p242 = por %p240, %p241
      %p243 = scmp.ne.s32.totalorder %s232, %s235
      %p244 = scmp.eq.s32.totalorder %s33, 3
      %p245 = por %p243, %p244
      %p246 = scmp.ne.s32.totalorder %s235, %s236
      %p247 = scmp.eq.s32.totalorder %s33, 0
      %p248 = por %p246, %p247
      %p249 = scmp.ne.s32.totalorder %s235, %s236
      %p250 = scmp.eq.s32.totalorder %s34, 3
      %p251 = por %p249, %p250
      %p253 = scmp.ne.s32.totalorder %s236, %s252
      %p254 = scmp.eq.s32.totalorder %s34, 0
      %p255 = por %p253, %p254
      %s256 = ssub.s32 %s35, %s47
      %s257 = ssub.s32 %s36, %s43
      %s258 = sor.u32 %s256, %s257
      %p259 = scmp.eq.s32.totalorder %s258, 0
      %s261 = sadd.s32 %s260, 1
      %s262 = scalar_select %p259, %s260, %s261
      %p265 = pneg %p259
      %p266 = scmp.eq.s32.totalorder %s28, 3
      %p267 = por %p265, %p266
      %p268 = scmp.ne.s32.totalorder %s260, %s263
      %p269 = scmp.eq.s32.totalorder %s28, 0
      %p270 = por %p268, %p269
      %p271 = scmp.ne.s32.totalorder %s260, %s263
      %p272 = scmp.eq.s32.totalorder %s33, 3
      %p273 = por %p271, %p272
      %p274 = scmp.ne.s32.totalorder %s263, %s264
      %p275 = scmp.eq.s32.totalorder %s33, 0
      %p276 = por %p274, %p275
      %p277 = scmp.ne.s32.totalorder %s263, %s264
      %p278 = scmp.eq.s32.totalorder %s34, 3
      %p279 = por %p277, %p278
      %p281 = scmp.ne.s32.totalorder %s264, %s280
      %p282 = scmp.eq.s32.totalorder %s34, 0
      %p283 = por %p281, %p282
      %p284 = scmp.le.s32.totalorder 1, %s28
      %p285 = scmp.lt.s32.totalorder %s28, 5
      %p286 = pnand %p284, %p285
      %p287 = pneg %p286
      // Predicated region
      $region9: #{tpu_custom_call.1} parent=5 // pred_check
        _
      $region10: #{tpu_custom_call.1} parent=5 // pred_check_branch
        %289 = sbr.rel (%p286) target = $region12
      $region11: #{tpu_custom_call.1} parent=5 // pred_region
        %s290 = ssub.s32 %s28, 1
        // Predicated region
        $region13: #{tpu_custom_call.1} parent=11 // pred_check
          %p291 = pneg %p157
        $region14: #{tpu_custom_call.1} parent=11 // pred_check_branch
          %293 = sbr.rel (%p291) target = $region16
        $region15: #{tpu_custom_call.1} parent=11 // pred_region
          %s295 = ssub.s32 512, 512
          %296 = vsyncadd [#allocation7], %s295
          %s297 = sshll.u32 [#allocation8], 4
          %s298 = int_to_ptr.vmem [resolvable:$true] %s297
          %303 = dma.hbm_to_vmem [thread:$0]  %s3, 512, %s298, [#allocation7], 128, 128, 8
        $region16: #{tpu_custom_call.1} parent=11 // pred_fallthru
          _
        // Predicated region
        $region17: #{tpu_custom_call.1} parent=11 // pred_check
          %p304 = pneg %p178
        $region18: #{tpu_custom_call.1} parent=11 // pred_check_branch
          %306 = sbr.rel (%p304) target = $region20
        $region19: #{tpu_custom_call.1} parent=11 // pred_region
          %s308 = ssub.s32 512, 512
          %309 = vsyncadd [#allocation10], %s308
          %s310 = sshll.u32 [#allocation9], 4
          %s311 = int_to_ptr.vmem [resolvable:$true] %s310
          %316 = dma.hbm_to_vmem [thread:$0]  %s4, 512, %s311, [#allocation10], 64, 64, 4
        $region20: #{tpu_custom_call.1} parent=11 // pred_fallthru
          _
        // Predicated region
        $region21: #{tpu_custom_call.1} parent=11 // pred_check
          %p317 = pneg %p199
        $region22: #{tpu_custom_call.1} parent=11 // pred_check_branch
          %319 = sbr.rel (%p317) target = $region24
        $region23: #{tpu_custom_call.1} parent=11 // pred_region
          _
        $region24: #{tpu_custom_call.1} parent=11 // pred_fallthru
          _
        // Predicated region
        $region25: #{tpu_custom_call.1} parent=11 // pred_check
          %p320 = pneg %p220
        $region26: #{tpu_custom_call.1} parent=11 // pred_check_branch
          %322 = sbr.rel (%p320) target = $region28
        $region27: #{tpu_custom_call.1} parent=11 // pred_region
          _
        $region28: #{tpu_custom_call.1} parent=11 // pred_fallthru
          _
      $region12: #{tpu_custom_call.1} parent=5 // pred_fallthru
        _
      %p323 = scmp.lt.s32.totalorder %s28, 4
      // Predicated region
      $region29: #{tpu_custom_call.1} parent=5 // pred_check
        %p324 = pneg %p323
      $region30: #{tpu_custom_call.1} parent=5 // pred_check_branch
        %326 = sbr.rel (%p324) target = $region32
      $region31: #{tpu_custom_call.1} parent=5 // pred_region
        // Predicated region
        $region33: #{tpu_custom_call.1} parent=31 // pred_check
          %p327 = pneg %p68
        $region34: #{tpu_custom_call.1} parent=31 // pred_check_branch
          %329 = sbr.rel (%p327) target = $region36
        $region35: #{tpu_custom_call.1} parent=31 // pred_region
          %s330 = sand.u32 %s58, 1
          %s331 = sand.u32 %s58, 1
          %s332 = smul.addr %s331, 32
          %s333 = scalar_lea.vmem [#allocation2], %s332
          %s334 = ssub.s32 %s36, 1
          %p335 = scmp.gt.s32.totalorder %s334, 0
          %s336 = scalar_select %p335, %s334, 0
          %s337 = smul.addr %s35, 8
          %s338 = sadd.s32 %s336, %s337
          %s339 = smul.addr %s338, 8
          %s340 = scalar_lea.vmem %s0, %s339
          // Predicated region
          $region37: #{tpu_custom_call.1} parent=35 // pred_check
            _
          $region38: #{tpu_custom_call.1} parent=35 // pred_check_branch
            %342 = sbr.rel (0) target = $region40
          $region39: #{tpu_custom_call.1} parent=35 // pred_region
            // Predicated region
            $region41: #{tpu_custom_call.1} parent=39 // pred_check
              _
            $region42: #{tpu_custom_call.1} parent=39 // pred_check_branch
              %344 = sbr.rel (0) target = $region44
            $region43: #{tpu_custom_call.1} parent=39 // pred_region
              // Predicated region
              $region56: #{tpu_custom_call.1} parent=43 // pred_check
                _
              $region57: #{tpu_custom_call.1} parent=43 // pred_check_branch
                %365 = sbr.rel (0) target = $region59
              $region58: #{tpu_custom_call.1} parent=43 // pred_region
                loop: start=0, step=1, limit=1
                $region60: #{tpu_custom_call.1} parent=58 // loop_pre_header
                  _
                $region61: #{tpu_custom_call.1} parent=58 // loop_header
                  %s367 = sphi 0, %s371
                  %p368 = scmp.ge.s32.totalorder %s367, 1
                  %s372 = sphi %s340, %s340
                  %s373 = sphi %s333, %s333
                $region62: #{tpu_custom_call.1} parent=58 // loop_header_branch
                  %370 = sbr.rel (%p368) target = $region66
                $region63: #{tpu_custom_call.1} parent=58 // loop_body
                  %v374 = vld [vmem:[%s372] sm:$0xff]
                  %375 = vst [vmem:[%s373] sm:$0xff] %v374
                  %v376 = vld [vmem:[%s372 + $0x10] sm:$0xff]
                  %377 = vst [vmem:[%s373 + $0x8] sm:$0xff] %v376
                  %v378 = vld [vmem:[%s372 + $0x20] sm:$0xff]
                  %379 = vst [vmem:[%s373 + $0x10] sm:$0xff] %v378
                  %v380 = vld [vmem:[%s372 + $0x30] sm:$0xff]
                  %381 = vst [vmem:[%s373 + $0x18] sm:$0xff] %v380
                $region64: #{tpu_custom_call.1} parent=58 // loop_footer
                  %s371 = sadd.s32 1, %s367
                $region65: #{tpu_custom_call.1} parent=58 // loop_footer_branch
                  %366 = sbr.rel target = $region61
                $region66: #{tpu_custom_call.1} parent=58 // loop_exit
                  _
              $region59: #{tpu_custom_call.1} parent=43 // pred_fallthru
                _
              // Predicated region
              $region67: #{tpu_custom_call.1} parent=43 // pred_check
                _
              $region68: #{tpu_custom_call.1} parent=43 // pred_check_branch
                %383 = sbr.rel target = $region70
              $region69: #{tpu_custom_call.1} parent=43 // pred_region
                _
              $region70: #{tpu_custom_call.1} parent=43 // pred_fallthru
                _
            $region44: #{tpu_custom_call.1} parent=39 // pred_fallthru
              _
            // Predicated region
            $region45: #{tpu_custom_call.1} parent=39 // pred_check
              _
            $region46: #{tpu_custom_call.1} parent=39 // pred_check_branch
              %346 = sbr.rel target = $region48
            $region47: #{tpu_custom_call.1} parent=39 // pred_region
              loop: start=0, step=1, limit=1
              $region49: #{tpu_custom_call.1} parent=47 // loop_pre_header
                _
              $region50: #{tpu_custom_call.1} parent=47 // loop_header
                %s349 = sphi 0, %s353
                %p350 = scmp.ge.s32.totalorder %s349, 1
                %s354 = sphi %s340, %s340
                %s355 = sphi %s333, %s333
              $region51: #{tpu_custom_call.1} parent=47 // loop_header_branch
                %352 = sbr.rel (%p350) target = $region55
              $region52: #{tpu_custom_call.1} parent=47 // loop_body
                %v356 = vld [vmem:[%s354] sm:$0xff]
                %357 = vst [vmem:[%s355] sm:$0xff] %v356
                %v358 = vld [vmem:[%s354 + $0x10] sm:$0xff]
                %359 = vst [vmem:[%s355 + $0x8] sm:$0xff] %v358
                %v360 = vld [vmem:[%s354 + $0x20] sm:$0xff]
                %361 = vst [vmem:[%s355 + $0x10] sm:$0xff] %v360
                %v362 = vld [vmem:[%s354 + $0x30] sm:$0xff]
                %363 = vst [vmem:[%s355 + $0x18] sm:$0xff] %v362
              $region53: #{tpu_custom_call.1} parent=47 // loop_footer
                %s353 = sadd.s32 1, %s349
              $region54: #{tpu_custom_call.1} parent=47 // loop_footer_branch
                %348 = sbr.rel target = $region50
              $region55: #{tpu_custom_call.1} parent=47 // loop_exit
                _
            $region48: #{tpu_custom_call.1} parent=39 // pred_fallthru
              _
          $region40: #{tpu_custom_call.1} parent=35 // pred_fallthru
            _
          %384 = vnop
        $region36: #{tpu_custom_call.1} parent=31 // pred_fallthru
          _
        // Predicated region
        $region71: #{tpu_custom_call.1} parent=31 // pred_check
          %p385 = pneg %p96
        $region72: #{tpu_custom_call.1} parent=31 // pred_check_branch
          %387 = sbr.rel (%p385) target = $region74
        $region73: #{tpu_custom_call.1} parent=31 // pred_region
          %s388 = sand.u32 %s86, 1
          %s389 = scalar_lea.sflag [#allocation4], %s388
          %s390 = sand.u32 %s86, 1
          %s391 = smul.addr %s390, 32
          %s392 = scalar_lea.vmem [#allocation3], %s391
          %s394 = ssub.s32 512, 512
          %395 = vsyncadd %s389, %s394
          %s396 = smul.addr %s35, 8
          %s397 = sadd.s32 %s36, %s396
          %s398 = smul.addr %s397, 128
          %s399 = scalar_lea.hbm %s1, %s398
          %s400 = sshll.u32 %s392, 4
          %s401 = int_to_ptr.vmem [resolvable:$true] %s400
          %406 = dma.hbm_to_vmem [thread:$0]  %s399, 512, %s401, %s389, 256, 128, 8
        $region74: #{tpu_custom_call.1} parent=31 // pred_fallthru
          _
        // Predicated region
        $region75: #{tpu_custom_call.1} parent=31 // pred_check
          %p407 = pneg %p130
        $region76: #{tpu_custom_call.1} parent=31 // pred_check_branch
          %409 = sbr.rel (%p407) target = $region78
        $region77: #{tpu_custom_call.1} parent=31 // pred_region
          %s410 = sand.u32 %s28, 1
          %s411 = scalar_lea.sflag [#allocation7], %s410
          %s412 = sand.u32 %s120, 1
          %s413 = smul.addr %s412, 32
          %s414 = scalar_lea.vmem [#allocation6], %s413
          %s415 = sadd.s32 %s36, 1
          %p416 = scmp.lt.s32.totalorder %s415, 1
          %s417 = scalar_select %p416, %s415, 1
          %s419 = ssub.s32 512, 512
          %420 = vsyncadd %s411, %s419
          %s421 = smul.addr %s35, 8
          %s422 = sadd.s32 %s417, %s421
          %s423 = smul.addr %s422, 128
          %s424 = scalar_lea.hbm %s2, %s423
          %s425 = sshll.u32 %s414, 4
          %s426 = int_to_ptr.vmem [resolvable:$true] %s425
          %431 = dma.hbm_to_vmem [thread:$0]  %s424, 512, %s426, %s411, 256, 128, 8
        $region78: #{tpu_custom_call.1} parent=31 // pred_fallthru
          _
      $region32: #{tpu_custom_call.1} parent=5 // pred_fallthru
        _
      %p432 = scmp.le.s32.totalorder 1, %s28
      %p433 = scmp.lt.s32.totalorder %s28, 5
      %p434 = pnand %p432, %p433
      %p435 = pneg %p434
      // Predicated region
      $region79: #{tpu_custom_call.1} parent=5 // pred_check
        _
      $region80: #{tpu_custom_call.1} parent=5 // pred_check_branch
        %437 = sbr.rel (%p434) target = $region82
      $region81: #{tpu_custom_call.1} parent=5 // pred_region
        %s438 = ssub.s32 %s28, 1
        %s439 = sand.u32 %s61, 1
        %s440 = sand.u32 %s61, 1
        %s441 = smul.addr %s440, 32
        %s442 = scalar_lea.vmem [#allocation2], %s441
        // Predicated region
        $region83: #{tpu_custom_call.1} parent=81 // pred_check
          %p443 = pneg %p74
        $region84: #{tpu_custom_call.1} parent=81 // pred_check_branch
          %445 = sbr.rel (%p443) target = $region86
        $region85: #{tpu_custom_call.1} parent=81 // pred_region
          _
        $region86: #{tpu_custom_call.1} parent=81 // pred_fallthru
          _
        %s446 = sand.u32 %s89, 1
        %s447 = scalar_lea.sflag [#allocation4], %s446
        %s448 = sand.u32 %s89, 1
        %s449 = smul.addr %s448, 32
        %s450 = scalar_lea.vmem [#allocation3], %s449
        // Predicated region
        $region87: #{tpu_custom_call.1} parent=81 // pred_check
          %p451 = pneg %p102
        $region88: #{tpu_custom_call.1} parent=81 // pred_check_branch
          %453 = sbr.rel (%p451) target = $region90
        $region89: #{tpu_custom_call.1} parent=81 // pred_region
          %454 = dma.done %s447, 512
        $region90: #{tpu_custom_call.1} parent=81 // pred_fallthru
          _
        %s455 = sand.u32 %s33, 1
        %s456 = scalar_lea.sflag [#allocation7], %s455
        %s457 = sand.u32 %s123, 1
        %s458 = smul.addr %s457, 32
        %s459 = scalar_lea.vmem [#allocation6], %s458
        // Predicated region
        $region91: #{tpu_custom_call.1} parent=81 // pred_check
          %p460 = pneg %p136
        $region92: #{tpu_custom_call.1} parent=81 // pred_check_branch
          %462 = sbr.rel (%p460) target = $region94
        $region93: #{tpu_custom_call.1} parent=81 // pred_region
          %463 = dma.done %s456, 512
        $region94: #{tpu_custom_call.1} parent=81 // pred_fallthru
          _
        // Predicated region
        $region95: #{tpu_custom_call.1} parent=81 // pred_check
          %p464 = pneg %p157
        $region96: #{tpu_custom_call.1} parent=81 // pred_check_branch
          %466 = sbr.rel (%p464) target = $region98
        $region97: #{tpu_custom_call.1} parent=81 // pred_region
          %467 = dma.done [#allocation7], 512
        $region98: #{tpu_custom_call.1} parent=81 // pred_fallthru
          _
        // Predicated region
        $region99: #{tpu_custom_call.1} parent=81 // pred_check
          %p468 = pneg %p178
        $region100: #{tpu_custom_call.1} parent=81 // pred_check_branch
          %470 = sbr.rel (%p468) target = $region102
        $region101: #{tpu_custom_call.1} parent=81 // pred_region
          %471 = dma.done [#allocation10], 512
        $region102: #{tpu_custom_call.1} parent=81 // pred_fallthru
          _
        %s472 = sand.u32 %s61, 1
        %s473 = sand.u32 %s61, 1
        %s474 = smul.addr %s473, 32
        %s475 = scalar_lea.vmem [#allocation2], %s474
        %p476 = pneg %p74
        %p477 = pneg %p71
        %s478 = sand.u32 %s89, 1
        %s479 = scalar_lea.sflag [#allocation4], %s478
        %s480 = sand.u32 %s89, 1
        %s481 = smul.addr %s480, 32
        %s482 = scalar_lea.vmem [#allocation3], %s481
        %p483 = pneg %p102
        %p484 = pneg %p99
        %s485 = sand.u32 %s33, 1
        %s486 = scalar_lea.sflag [#allocation7], %s485
        %s487 = sand.u32 %s123, 1
        %s488 = smul.addr %s487, 32
        %s489 = scalar_lea.vmem [#allocation6], %s488
        %p490 = pneg %p136
        %p491 = pneg %p133
        %p492 = pneg %p157
        %p493 = pneg %p154
        %p494 = pneg %p178
        %p495 = pneg %p175
        %p496 = pneg %p199
        %p497 = pneg %p196
        %p498 = pneg %p220
        %p499 = pneg %p217
        %p500 = pneg %p248
        %p501 = pneg %p245
        %s502 = sand.u32 %s235, 1
        %s503 = scalar_lea.sflag [#allocation5], %s502
        %s504 = sand.u32 %s235, 1
        %s505 = smul.addr %s504, 32
        %s506 = scalar_lea.vmem [#allocation11], %s505
        %p507 = pneg %p276
        %p508 = pneg %p273
        %s509 = sand.u32 %s263, 1
        %s510 = scalar_lea.sflag [#allocation13], %s509
        %s511 = sand.u32 %s263, 1
        %s512 = smul.addr %s511, 32
        %s513 = scalar_lea.vmem [#allocation12], %s512
        %s514 = ssub.s32 %s38, 1
        %p515 = scmp.gt.s32.totalorder %s514, 0
        %s516 = scalar_select %p515, %s514, 0
        %s517 = sadd.s32 %s38, 1
        %p518 = scmp.lt.s32.totalorder %s517, 1
        %s519 = scalar_select %p518, %s517, 1
        %p521 = scmp.eq.s32.totalorder %s38, 0
        %p522 = scmp.eq.s32.totalorder %s38, 1
        %v523 = vld [vmem:[%s450] sm:$0xff]
        %v524 = vld [vmem:[%s450 + $0x8] sm:$0xff]
        %v525 = vld [vmem:[%s450 + $0x10] sm:$0xff]
        %v526 = vld [vmem:[%s450 + $0x18] sm:$0xff]
        %v527 = vld [vmem:[%s442] sm:$0xff]
        %v528 = vld [vmem:[%s442 + $0x8] sm:$0xff]
        %v529 = vld [vmem:[%s442 + $0x10] sm:$0xff]
        %v530 = vld [vmem:[%s442 + $0x18] sm:$0xff]
        %v531 = vld [vmem:[%s459] sm:$0xff]
        %v532 = vld [vmem:[%s459 + $0x8] sm:$0xff]
        %v533 = vld [vmem:[%s459 + $0x10] sm:$0xff]
        %v534 = vld [vmem:[%s459 + $0x18] sm:$0xff]
        %s535 = scalar_select %p521, 1, 0
        %v536 = vstv %s535
        %vm537 = vcmp.eq.s32.totalorder %v536, 1
        %v538 = vsel %vm537, 0.0, %v527
        %v539 = vsel %vm537, 0.0, %v528
        %v540 = vsel %vm537, 0.0, %v529
        %v541 = vsel %vm537, 0.0, %v530
        %s542 = scalar_select %p522, 1, 0
        %v543 = vstv %s542
        %vm544 = vcmp.eq.s32.totalorder %v543, 1
        %v545 = vsel %vm544, 0.0, %v531
        %v546 = vsel %vm544, 0.0, %v532
        %v547 = vsel %vm544, 0.0, %v533
        %v548 = vsel %vm544, 0.0, %v534
        %553 = vrot.lane.b32.xlu0 %v538, 3
        %v554 = vpop.permute.xlu0 %553
        %555 = vrot.lane.b32.xlu0 %v539, 3
        %v556 = vpop.permute.xlu0 %555
        %557 = vrot.lane.b32.xlu0 %v540, 3
        %v558 = vpop.permute.xlu0 %557
        %559 = vrot.lane.b32.xlu0 %v541, 3
        %v560 = vpop.permute.xlu0 %559
        %569 = vrot.lane.b32.xlu0 %v523, 3
        %v570 = vpop.permute.xlu0 %569
        %571 = vrot.lane.b32.xlu0 %v524, 3
        %v572 = vpop.permute.xlu0 %571
        %573 = vrot.lane.b32.xlu0 %v525, 3
        %v574 = vpop.permute.xlu0 %573
        %575 = vrot.lane.b32.xlu0 %v526, 3
        %v576 = vpop.permute.xlu0 %575
        %585 = vrot.lane.b32.xlu0 %v545, 3
        %v586 = vpop.permute.xlu0 %585
        %587 = vrot.lane.b32.xlu0 %v546, 3
        %v588 = vpop.permute.xlu0 %587
        %589 = vrot.lane.b32.xlu0 %v547, 3
        %v590 = vpop.permute.xlu0 %589
        %591 = vrot.lane.b32.xlu0 %v548, 3
        %v592 = vpop.permute.xlu0 %591
        %vm597 = vcmask 23552
        %v598 = vsel %vm597, %v554, %v570
        %v599 = vsel %vm597, %v556, %v572
        %v600 = vsel %vm597, %v558, %v574
        %v601 = vsel %vm597, %v560, %v576
        %v602 = vsel %vm597, %v570, %v586
        %v603 = vsel %vm597, %v572, %v588
        %v604 = vsel %vm597, %v574, %v590
        %v605 = vsel %vm597, %v576, %v592
        %v606 = vpack.c.bf16 %v599, %v598
        %v607 = vpack.c.bf16 %v603, %v602
        %v608 = vpack.c.bf16 %v601, %v600
        %v609 = vpack.c.bf16 %v605, %v604
        %614 = vrot.lane.b32.xlu0 %v606, 127
        %v615 = vpop.permute.xlu0 %614
        %616 = vrot.lane.b32.xlu0 %v607, 127
        %v617 = vpop.permute.xlu0 %616
        %618 = vrot.lane.b32.xlu0 %v608, 127
        %v619 = vpop.permute.xlu0 %618
        %620 = vrot.lane.b32.xlu0 %v609, 127
        %v621 = vpop.permute.xlu0 %620
        %vm622 = vcmask 1039360
        %v623 = vsel %vm622, %v615, %v617
        %v624 = vsel %vm622, %v619, %v621
        %629 = vrot.lane.b32.xlu0 %v606, 126
        %v630 = vpop.permute.xlu0 %629
        %631 = vrot.lane.b32.xlu0 %v607, 126
        %v632 = vpop.permute.xlu0 %631
        %633 = vrot.lane.b32.xlu0 %v608, 126
        %v634 = vpop.permute.xlu0 %633
        %635 = vrot.lane.b32.xlu0 %v609, 126
        %v636 = vpop.permute.xlu0 %635
        %vm637 = vcmask 1031168
        %v638 = vsel %vm637, %v630, %v632
        %v639 = vsel %vm637, %v634, %v636
        %644 = vrot.lane.b32.xlu0 %v606, 125
        %v645 = vpop.permute.xlu0 %644
        %646 = vrot.lane.b32.xlu0 %v607, 125
        %v647 = vpop.permute.xlu0 %646
        %648 = vrot.lane.b32.xlu0 %v608, 125
        %v649 = vpop.permute.xlu0 %648
        %650 = vrot.lane.b32.xlu0 %v609, 125
        %v651 = vpop.permute.xlu0 %650
        %vm652 = vcmask 1022976
        %v653 = vsel %vm652, %v645, %v647
        %v654 = vsel %vm652, %v649, %v651
        %659 = vrot.lane.b32.xlu0 %v606, 124
        %v660 = vpop.permute.xlu0 %659
        %661 = vrot.lane.b32.xlu0 %v607, 124
        %v662 = vpop.permute.xlu0 %661
        %663 = vrot.lane.b32.xlu0 %v608, 124
        %v664 = vpop.permute.xlu0 %663
        %665 = vrot.lane.b32.xlu0 %v609, 124
        %v666 = vpop.permute.xlu0 %665
        %vm667 = vcmask 1014784
        %v668 = vsel %vm667, %v660, %v662
        %v669 = vsel %vm667, %v664, %v666
        %v674 = vld [vmem:[%s6] sm:$0xff]
        %v675 = vld [vmem:[%s6 + $0x8] sm:$0xff]
        %v676 = vld [vmem:[%s6 + $0x10] sm:$0xff]
        %v677 = vld [vmem:[%s6 + $0x18] sm:$0xff]
        %v678 = vld [vmem:[%s6 + $0x20] sm:$0xff]
        %v679 = vld [vmem:[%s6 + $0x28] sm:$0xff]
        %v680 = vld [vmem:[%s6 + $0x30] sm:$0xff]
        %v681 = vld [vmem:[%s6 + $0x38] sm:$0xff]
        %v682 = vld [vmem:[%s6 + $0x40] sm:$0xff]
        %v683 = vld [vmem:[%s6 + $0x48] sm:$0xff]
        %v684 = vld [vmem:[%s6 + $0x50] sm:$0xff]
        %v685 = vld [vmem:[%s6 + $0x58] sm:$0xff]
        %v686 = vld [vmem:[%s6 + $0x60] sm:$0xff]
        %v687 = vld [vmem:[%s6 + $0x68] sm:$0xff]
        %v688 = vld [vmem:[%s6 + $0x70] sm:$0xff]
        %v689 = vld [vmem:[%s6 + $0x78] sm:$0xff]
        %v690 = vld [vmem:[#allocation8] sm:$0xff]
        %v691 = vld [vmem:[#allocation8 + $0x8] sm:$0xff]
        %v692 = vld [vmem:[#allocation8 + $0x10] sm:$0xff]
        %v693 = vld [vmem:[#allocation8 + $0x18] sm:$0xff]
        %695 = vset.pattern.permute.xlu0 0
        %696 = vperm.xlu0 %695, %v674
        %v697 = vpop.permute.xlu0 %696
        %700 = vset.pattern.permute.xlu0 0
        %701 = vperm.xlu0 %700, %v675
        %v702 = vpop.permute.xlu0 %701
        %705 = vset.pattern.permute.xlu0 0
        %706 = vperm.xlu0 %705, %v676
        %v707 = vpop.permute.xlu0 %706
        %710 = vset.pattern.permute.xlu0 0
        %711 = vperm.xlu0 %710, %v677
        %v712 = vpop.permute.xlu0 %711
        %v718 = vunpack.c.l.b16 %v690
        %v719 = vunpack.c.h.b16 %v690
        %v720 = vunpack.c.l.b16 %v691
        %v721 = vunpack.c.h.b16 %v691
        %v722 = vunpack.c.l.b16 %v692
        %v723 = vunpack.c.h.b16 %v692
        %v724 = vunpack.c.l.b16 %v693
        %v725 = vunpack.c.h.b16 %v693
        %v726 = vpack.c.b16 %v720, %v718
        %v727 = vpack.c.b16 %v721, %v719
        %v728 = vpack.c.b16 %v724, %v722
        %v729 = vpack.c.b16 %v725, %v723
        %vm732 = vcmask 261120
        %v734 = vsel %vm732, %v727, 0
        %v737 = vsel %vm732, %v729, 0
        %739 = vmatprep.subr.bf16.mxu0 %v607
        %740 = vmatpush1.bf16.msra.mxu0 %v606
        %741 = vmatprep.subr.bf16.mxu0 %v609
        %742 = vmatpush1.bf16.msra.mxu0 %v608
        %743 = vmatprep.subr.bf16.mxu0 %v617
        %744 = vmatpush1.bf16.msra.mxu0 %v623
        %745 = vmatprep.subr.bf16.mxu0 %v621
        %746 = vmatpush1.bf16.msra.mxu0 %v624
        %747 = vmatprep.subr.bf16.mxu0 %v632
        %748 = vmatpush1.bf16.msra.mxu0 %v638
        %749 = vmatprep.subr.bf16.mxu0 %v636
        %750 = vmatpush1.bf16.msra.mxu0 %v639
        %751 = vmatprep.subr.bf16.mxu0 %v647
        %752 = vmatpush1.bf16.msra.mxu0 %v653
        %753 = vmatprep.subr.bf16.mxu0 %v651
        %754 = vmatpush1.bf16.msra.mxu0 %v654
        %755 = vmatprep.subr.bf16.mxu0 %v662
        %756 = vmatpush1.bf16.msra.mxu0 %v668
        %757 = vmatprep.subr.bf16.mxu0 %v666
        %758 = vmatpush1.bf16.msra.mxu0 %v669
        %759 = vmatprep.subr.bf16.mxu0 0
        %760 = vmatpush1.bf16.msra.mxu0 0
        %761 = vmatprep.subr.bf16.mxu0 0
        %762 = vmatpush1.bf16.msra.mxu0 0
        %763 = vmatprep.subr.bf16.mxu0 0
        %764 = vmatpush1.bf16.msra.mxu0 0
        %765 = vmatprep.subr.bf16.mxu0 0
        %766 = vmatpush1.bf16.msra.mxu0 0
        %767 = vmatprep.subr.bf16.mxu0 0
        %768 = vmatpush1.bf16.msra.mxu0 0
        %769 = vmatprep.subr.bf16.mxu0 0
        %770 = vmatpush1.bf16.msra.mxu0 0
        %771 = vmatprep.mubr.bf16.mxu0 %v734
        %772 = vmatmul.mubr.bf16.gmra.mrb[0].mxu0 %v726
        %v773 = vpop.f32.mrb[0].mxu0
        %v774 = vadd.f32 %v697, %v773
        %v775 = vpop.f32.mrb[0].mxu0
        %v776 = vadd.f32 %v697, %v775
        %v777 = vpop.f32.mrb[0].mxu0
        %v778 = vadd.f32 %v702, %v777
        %v779 = vpop.f32.mrb[0].mxu0
        %v780 = vadd.f32 %v702, %v779
        %781 = vmatprep.mubr.bf16.mxu0 %v737
        %782 = vmatmul.mubr.bf16.gmra.mrb[0].mxu0 %v728
        %v783 = vpop.f32.mrb[0].mxu0
        %v784 = vadd.f32 %v707, %v783
        %v785 = vpop.f32.mrb[0].mxu0
        %v786 = vadd.f32 %v707, %v785
        %v787 = vpop.f32.mrb[0].mxu0
        %v788 = vadd.f32 %v712, %v787
        %v789 = vpop.f32.mrb[0].mxu0
        %v790 = vadd.f32 %v712, %v789
        %791 = vdwg.mxu0
        %v792 = vlaneseq
        %v793 = vand.u32 %v792, 127
        %v794 = vadd.s32 %v793, 128
        %vm795 = vcmp.lt.s32.totalorder %v793, 1
        %vm796 = vcmp.lt.s32.totalorder %v794, 1
        %vm797 = vmand %vm537, %vm795
        %vm798 = vmand %vm537, %vm796
        %vm799 = vcmp.ge.s32.totalorder %v793, 129
        %vm800 = vcmp.ge.s32.totalorder %v794, 129
        %vm801 = vmand %vm544, %vm799
        %vm802 = vmand %vm544, %vm800
        %vm803 = vmor %vm797, %vm801
        %vm804 = vmor %vm798, %vm802
        %v805 = vsel %vm803, 1, 0
        %v806 = vsel %vm804, 1, 0
        %vm807 = vcmp.eq.s32.totalorder %v805, 1
        %vm808 = vcmp.eq.s32.totalorder %v806, 1
        %v809 = vsel %vm807, 0.0, %v774
        %v810 = vsel %vm808, 0.0, %v776
        %v811 = vsel %vm807, 0.0, %v778
        %v812 = vsel %vm808, 0.0, %v780
        %v813 = vsel %vm807, 0.0, %v784
        %v814 = vsel %vm808, 0.0, %v786
        %v815 = vsel %vm807, 0.0, %v788
        %v816 = vsel %vm808, 0.0, %v790
        %v817 = vpack.c.bf16 %v811, %v809
        %v818 = vpack.c.bf16 %v812, %v810
        %v819 = vpack.c.bf16 %v815, %v813
        %v820 = vpack.c.bf16 %v816, %v814
        %825 = vrot.lane.b32.xlu0 %v817, 127
        %v826 = vpop.permute.xlu0 %825
        %827 = vrot.lane.b32.xlu0 %v818, 127
        %v828 = vpop.permute.xlu0 %827
        %829 = vrot.lane.b32.xlu0 %v819, 127
        %v830 = vpop.permute.xlu0 %829
        %831 = vrot.lane.b32.xlu0 %v820, 127
        %v832 = vpop.permute.xlu0 %831
        %v833 = vsel %vm622, %v826, %v828
        %v834 = vsel %vm622, %v830, %v832
        %837 = vrot.lane.b32.xlu0 %v817, 126
        %v838 = vpop.permute.xlu0 %837
        %839 = vrot.lane.b32.xlu0 %v818, 126
        %v840 = vpop.permute.xlu0 %839
        %841 = vrot.lane.b32.xlu0 %v819, 126
        %v842 = vpop.permute.xlu0 %841
        %843 = vrot.lane.b32.xlu0 %v820, 126
        %v844 = vpop.permute.xlu0 %843
        %v845 = vsel %vm637, %v838, %v840
        %v846 = vsel %vm637, %v842, %v844
        %v849 = vld [vmem:[#allocation9] sm:$0xf]
        %v850 = vld [vmem:[#allocation9 + $0x4] sm:$0xf]
        %v851 = vld [vmem:[#allocation9 + $0x8] sm:$0xf]
        %v852 = vld [vmem:[#allocation9 + $0xc] sm:$0xf]
        %v853 = vld [vmem:[#allocation9 + $0x10] sm:$0xf]
        %v854 = vld [vmem:[#allocation9 + $0x14] sm:$0xf]
        %v855 = vld [vmem:[#allocation9 + $0x18] sm:$0xf]
        %v856 = vld [vmem:[#allocation9 + $0x1c] sm:$0xf]
        %858 = vset.pattern.permute.xlu0 0
        %859 = vperm.xlu0 %858, %v678
        %v860 = vpop.permute.xlu0 %859
        %863 = vset.pattern.permute.xlu0 0
        %864 = vperm.xlu0 %863, %v679
        %v865 = vpop.permute.xlu0 %864
        %868 = vset.pattern.permute.xlu0 0
        %869 = vperm.xlu0 %868, %v680
        %v870 = vpop.permute.xlu0 %869
        %873 = vset.pattern.permute.xlu0 0
        %874 = vperm.xlu0 %873, %v681
        %v875 = vpop.permute.xlu0 %874
        %878 = vset.pattern.permute.xlu0 0
        %879 = vperm.xlu0 %878, %v682
        %v880 = vpop.permute.xlu0 %879
        %883 = vset.pattern.permute.xlu0 0
        %884 = vperm.xlu0 %883, %v683
        %v885 = vpop.permute.xlu0 %884
        %888 = vset.pattern.permute.xlu0 0
        %889 = vperm.xlu0 %888, %v684
        %v890 = vpop.permute.xlu0 %889
        %893 = vset.pattern.permute.xlu0 0
        %894 = vperm.xlu0 %893, %v685
        %v895 = vpop.permute.xlu0 %894
        %v905 = vunpack.c.l.b16 %v849
        %v906 = vunpack.c.l.b16 %v850
        %v907 = vunpack.c.l.b16 %v851
        %v908 = vunpack.c.l.b16 %v852
        %v909 = vunpack.c.l.b16 %v853
        %v910 = vunpack.c.l.b16 %v854
        %v911 = vunpack.c.l.b16 %v855
        %v912 = vunpack.c.l.b16 %v856
        %v913 = vpack.c.b16 %v906, %v905
        %v914 = vpack.c.b16 %v908, %v907
        %v915 = vpack.c.b16 %v910, %v909
        %v916 = vpack.c.b16 %v912, %v911
        %vm917 = vcmask 785408
        %v919 = vsel %vm917, %v913, 0
        %v922 = vsel %vm917, %v914, 0
        %v925 = vsel %vm917, %v915, 0
        %v928 = vsel %vm917, %v916, 0
        %930 = vmatprep.subr.bf16.mxu0 0
        %931 = vmatpush1.bf16.msra.mxu0 %v817
        %932 = vmatprep.subr.bf16.mxu0 0
        %933 = vmatpush1.bf16.msra.mxu0 %v819
        %934 = vmatprep.subr.bf16.mxu0 0
        %935 = vmatpush1.bf16.msra.mxu0 %v833
        %936 = vmatprep.subr.bf16.mxu0 0
        %937 = vmatpush1.bf16.msra.mxu0 %v834
        %938 = vmatprep.subr.bf16.mxu0 0
        %939 = vmatpush1.bf16.msra.mxu0 %v845
        %940 = vmatprep.subr.bf16.mxu0 0
        %941 = vmatpush1.bf16.msra.mxu0 %v846
        %942 = vmatprep.subr.bf16.mxu0 0
        %943 = vmatpush1.bf16.msra.mxu0 0
        %944 = vmatprep.subr.bf16.mxu0 0
        %945 = vmatpush1.bf16.msra.mxu0 0
        %946 = vmatprep.subr.bf16.mxu0 0
        %947 = vmatpush1.bf16.msra.mxu0 0
        %948 = vmatprep.subr.bf16.mxu0 0
        %949 = vmatpush1.bf16.msra.mxu0 0
        %950 = vmatprep.subr.bf16.mxu0 0
        %951 = vmatpush1.bf16.msra.mxu0 0
        %952 = vmatprep.subr.bf16.mxu0 0
        %953 = vmatpush1.bf16.msra.mxu0 0
        %954 = vmatprep.subr.bf16.mxu0 0
        %955 = vmatpush1.bf16.msra.mxu0 0
        %956 = vmatprep.subr.bf16.mxu0 0
        %957 = vmatpush1.bf16.msra.mxu0 0
        %958 = vmatprep.subr.bf16.mxu0 0
        %959 = vmatpush1.bf16.msra.mxu0 0
        %960 = vmatprep.subr.bf16.mxu0 0
        %961 = vmatpush1.bf16.msra.mxu0 0
        %962 = vmatprep.mubr.bf16.mxu0 0
        %963 = vmatmul.mubr.bf16.gmra.mrb[0].mxu0 %v919
        %v964 = vpop.f32.mrb[0].mxu0
        %v965 = vadd.f32 %v860, %v964
        %v966 = vpop.f32.mrb[0].mxu0
        %v967 = vpop.f32.mrb[0].mxu0
        %v968 = vadd.f32 %v865, %v967
        %v969 = vpop.f32.mrb[0].mxu0
        %970 = vmatprep.mubr.bf16.mxu0 0
        %971 = vmatmul.mubr.bf16.gmra.mrb[0].mxu0 %v922
        %v972 = vpop.f32.mrb[0].mxu0
        %v973 = vadd.f32 %v870, %v972
        %v974 = vpop.f32.mrb[0].mxu0
        %v975 = vpop.f32.mrb[0].mxu0
        %v976 = vadd.f32 %v875, %v975
        %v977 = vpop.f32.mrb[0].mxu0
        %978 = vmatprep.mubr.bf16.mxu0 0
        %979 = vmatmul.mubr.bf16.gmra.mrb[0].mxu0 %v925
        %v980 = vpop.f32.mrb[0].mxu0
        %v981 = vadd.f32 %v880, %v980
        %v982 = vpop.f32.mrb[0].mxu0
        %v983 = vpop.f32.mrb[0].mxu0
        %v984 = vadd.f32 %v885, %v983
        %v985 = vpop.f32.mrb[0].mxu0
        %986 = vmatprep.mubr.bf16.mxu0 0
        %987 = vmatmul.mubr.bf16.gmra.mrb[0].mxu0 %v928
        %v988 = vpop.f32.mrb[0].mxu0
        %v989 = vadd.f32 %v890, %v988
        %v990 = vpop.f32.mrb[0].mxu0
        %v991 = vpop.f32.mrb[0].mxu0
        %v992 = vadd.f32 %v895, %v991
        %v993 = vpop.f32.mrb[0].mxu0
        %994 = vdwg.mxu0
        %v995 = vxor.u32 %v965, 2147483648
        %v996 = vxor.u32 %v968, 2147483648
        %v997 = vxor.u32 %v973, 2147483648
        %v998 = vxor.u32 %v976, 2147483648
        %v999 = vmul.f32 %v995, 1.442695
        %v1000 = vpow.pop %v999
        %v1001 = vmul.f32 %v996, 1.442695
        %v1002 = vpow.pop %v1001
        %v1003 = vmul.f32 %v997, 1.442695
        %v1004 = vpow.pop %v1003
        %v1005 = vmul.f32 %v998, 1.442695
        %v1006 = vpow.pop %v1005
        %v1007 = vadd.f32 %v1000, 1.0
        %v1008 = vadd.f32 %v1002, 1.0
        %v1009 = vadd.f32 %v1004, 1.0
        %v1010 = vadd.f32 %v1006, 1.0
        %v1011 = vrcp.pop %v1007
        %v1012 = vmul.f32 1.0, %v1011
        %v1013 = vrcp.pop %v1008
        %v1014 = vmul.f32 1.0, %v1013
        %v1015 = vrcp.pop %v1009
        %v1016 = vmul.f32 1.0, %v1015
        %v1017 = vrcp.pop %v1010
        %v1018 = vmul.f32 1.0, %v1017
        %v1019 = vtanh.pop %v981
        %v1020 = vtanh.pop %v984
        %v1021 = vtanh.pop %v989
        %v1022 = vtanh.pop %v992
        %v1023 = vmul.f32 %v1012, %v1019
        %v1024 = vmul.f32 %v1014, %v1020
        %v1025 = vmul.f32 %v1016, %v1021
        %v1026 = vmul.f32 %v1018, %v1022
        %v1027 = vld [vmem:[%s5] sm:$0xf]
        %v1028 = vld [vmem:[%s5 + $0x4] sm:$0xf]
        %v1029 = vld [vmem:[%s5 + $0x8] sm:$0xf]
        %v1030 = vld [vmem:[%s5 + $0xc] sm:$0xf]
        %v1031 = vpack.c.bf16 %v1024, %v1023
        %v1032 = vpack.c.bf16 %v1026, %v1025
        %1034 = vset.pattern.permute.xlu0 0
        %1035 = vperm.xlu0 %1034, %v686
        %v1036 = vpop.permute.xlu0 %1035
        %1039 = vset.pattern.permute.xlu0 0
        %1040 = vperm.xlu0 %1039, %v687
        %v1041 = vpop.permute.xlu0 %1040
        %1044 = vset.pattern.permute.xlu0 0
        %1045 = vperm.xlu0 %1044, %v688
        %v1046 = vpop.permute.xlu0 %1045
        %1049 = vset.pattern.permute.xlu0 0
        %1050 = vperm.xlu0 %1049, %v689
        %v1051 = vpop.permute.xlu0 %1050
        %v1057 = vunpack.c.l.b16 %v1027
        %v1058 = vunpack.c.l.b16 %v1028
        %v1059 = vunpack.c.l.b16 %v1029
        %v1060 = vunpack.c.l.b16 %v1030
        %v1061 = vpack.c.b16 %v1058, %v1057
        %v1062 = vpack.c.b16 %v1060, %v1059
        %v1064 = vsel %vm732, %v1061, 0
        %v1067 = vsel %vm732, %v1062, 0
        %1069 = vmatprep.subr.bf16.mxu0 0
        %1070 = vmatpush1.bf16.msra.mxu0 %v1031
        %1071 = vmatprep.subr.bf16.mxu0 0
        %1072 = vmatpush1.bf16.msra.mxu0 %v1032
        %1073 = vmatprep.subr.bf16.mxu0 0
        %1074 = vmatpush1.bf16.msra.mxu0 0
        %1075 = vmatprep.subr.bf16.mxu0 0
        %1076 = vmatpush1.bf16.msra.mxu0 0
        %1077 = vmatprep.subr.bf16.mxu0 0
        %1078 = vmatpush1.bf16.msra.mxu0 0
        %1079 = vmatprep.subr.bf16.mxu0 0
        %1080 = vmatpush1.bf16.msra.mxu0 0
        %1081 = vmatprep.subr.bf16.mxu0 0
        %1082 = vmatpush1.bf16.msra.mxu0 0
        %1083 = vmatprep.subr.bf16.mxu0 0
        %1084 = vmatpush1.bf16.msra.mxu0 0
        %1085 = vmatprep.subr.bf16.mxu0 0
        %1086 = vmatpush1.bf16.msra.mxu0 0
        %1087 = vmatprep.subr.bf16.mxu0 0
        %1088 = vmatpush1.bf16.msra.mxu0 0
        %1089 = vmatprep.subr.bf16.mxu0 0
        %1090 = vmatpush1.bf16.msra.mxu0 0
        %1091 = vmatprep.subr.bf16.mxu0 0
        %1092 = vmatpush1.bf16.msra.mxu0 0
        %1093 = vmatprep.subr.bf16.mxu0 0
        %1094 = vmatpush1.bf16.msra.mxu0 0
        %1095 = vmatprep.subr.bf16.mxu0 0
        %1096 = vmatpush1.bf16.msra.mxu0 0
        %1097 = vmatprep.subr.bf16.mxu0 0
        %1098 = vmatpush1.bf16.msra.mxu0 0
        %1099 = vmatprep.subr.bf16.mxu0 0
        %1100 = vmatpush1.bf16.msra.mxu0 0
        %1101 = vmatprep.mubr.bf16.mxu0 0
        %1102 = vmatmul.mubr.bf16.gmra.mrb[0].mxu0 %v1064
        %v1103 = vpop.f32.mrb[0].mxu0
        %v1104 = vadd.f32 %v1036, %v1103
        %v1105 = vpop.f32.mrb[0].mxu0
        %v1106 = vpop.f32.mrb[0].mxu0
        %v1107 = vadd.f32 %v1041, %v1106
        %v1108 = vpop.f32.mrb[0].mxu0
        %1109 = vmatprep.mubr.bf16.mxu0 0
        %1110 = vmatmul.mubr.bf16.gmra.mrb[0].mxu0 %v1067
        %v1111 = vpop.f32.mrb[0].mxu0
        %v1112 = vadd.f32 %v1046, %v1111
        %v1113 = vpop.f32.mrb[0].mxu0
        %v1114 = vpop.f32.mrb[0].mxu0
        %v1115 = vadd.f32 %v1051, %v1114
        %v1116 = vpop.f32.mrb[0].mxu0
        %1117 = vdwg.mxu0
        %v1118 = vadd.f32 %v523, %v1104
        %v1119 = vadd.f32 %v524, %v1107
        %v1120 = vadd.f32 %v525, %v1112
        %v1121 = vadd.f32 %v526, %v1115
        %1122 = vst [vmem:[%s506] sm:$0xff] %v1118
        %1123 = vst [vmem:[%s506 + $0x8] sm:$0xff] %v1119
        %1124 = vst [vmem:[%s506 + $0x10] sm:$0xff] %v1120
        %1125 = vst [vmem:[%s506 + $0x18] sm:$0xff] %v1121
        %1126 = vst [vmem:[%s513] sm:$0xff] %v1104
        %1127 = vst [vmem:[%s513 + $0x8] sm:$0xff] %v1107
        %1128 = vst [vmem:[%s513 + $0x10] sm:$0xff] %v1112
        %1129 = vst [vmem:[%s513 + $0x18] sm:$0xff] %v1115
        %s1130 = sand.u32 %s235, 1
        %s1131 = scalar_lea.sflag [#allocation5], %s1130
        %s1132 = sand.u32 %s235, 1
        %s1133 = smul.addr %s1132, 32
        %s1134 = scalar_lea.vmem [#allocation11], %s1133
        %s1135 = sand.u32 %s263, 1
        %s1136 = scalar_lea.sflag [#allocation13], %s1135
        %s1137 = sand.u32 %s263, 1
        %s1138 = smul.addr %s1137, 32
        %s1139 = scalar_lea.vmem [#allocation12], %s1138
        // Predicated region
        $region103: #{tpu_custom_call.1} parent=81 // pred_check
          %p1140 = pneg %p245
        $region104: #{tpu_custom_call.1} parent=81 // pred_check_branch
          %1142 = sbr.rel (%p1140) target = $region106
        $region105: #{tpu_custom_call.1} parent=81 // pred_region
          %s1144 = ssub.s32 512, 512
          %1145 = vsyncadd %s1131, %s1144
          %s1146 = smul.addr %s37, 8
          %s1147 = sadd.s32 %s38, %s1146
          %s1148 = smul.addr %s1147, 128
          %s1149 = scalar_lea.hbm %s7, %s1148
          %s1150 = sshll.u32 %s1134, 4
          %s1151 = int_to_ptr.vmem [resolvable:$true] %s1150
          %1156 = dma.vmem_to_hbm [thread:$0]  %s1151, 512, %s1149, %s1131, 128, 256, 8
        $region106: #{tpu_custom_call.1} parent=81 // pred_fallthru
          _
        // Predicated region
        $region107: #{tpu_custom_call.1} parent=81 // pred_check
          %p1157 = pneg %p273
        $region108: #{tpu_custom_call.1} parent=81 // pred_check_branch
          %1159 = sbr.rel (%p1157) target = $region110
        $region109: #{tpu_custom_call.1} parent=81 // pred_region
          %s1161 = ssub.s32 512, 512
          %1162 = vsyncadd %s1136, %s1161
          %s1163 = smul.addr %s37, 8
          %s1164 = sadd.s32 %s38, %s1163
          %s1165 = smul.addr %s1164, 128
          %s1166 = scalar_lea.hbm %s8, %s1165
          %s1167 = sshll.u32 %s1139, 4
          %s1168 = int_to_ptr.vmem [resolvable:$true] %s1167
          %1173 = dma.vmem_to_hbm [thread:$0]  %s1168, 512, %s1166, %s1136, 128, 256, 8
        $region110: #{tpu_custom_call.1} parent=81 // pred_fallthru
          _
      $region82: #{tpu_custom_call.1} parent=5 // pred_fallthru
        _
      %p1174 = scmp.le.s32.totalorder 2, %s28
      // Predicated region
      $region111: #{tpu_custom_call.1} parent=5 // pred_check
        %p1175 = pneg %p1174
      $region112: #{tpu_custom_call.1} parent=5 // pred_check_branch
        %1177 = sbr.rel (%p1175) target = $region114
      $region113: #{tpu_custom_call.1} parent=5 // pred_region
        %s1178 = ssub.s32 %s28, 2
        // Predicated region
        $region115: #{tpu_custom_call.1} parent=113 // pred_check
          %p1179 = pneg %p251
        $region116: #{tpu_custom_call.1} parent=113 // pred_check_branch
          %1181 = sbr.rel (%p1179) target = $region118
        $region117: #{tpu_custom_call.1} parent=113 // pred_region
          %s1182 = sand.u32 %s236, 1
          %s1183 = scalar_lea.sflag [#allocation5], %s1182
          %s1184 = sand.u32 %s236, 1
          %s1185 = smul.addr %s1184, 32
          %s1186 = scalar_lea.vmem [#allocation11], %s1185
          %1187 = dma.done %s1183, 512
        $region118: #{tpu_custom_call.1} parent=113 // pred_fallthru
          _
        // Predicated region
        $region119: #{tpu_custom_call.1} parent=113 // pred_check
          %p1188 = pneg %p279
        $region120: #{tpu_custom_call.1} parent=113 // pred_check_branch
          %1190 = sbr.rel (%p1188) target = $region122
        $region121: #{tpu_custom_call.1} parent=113 // pred_region
          %s1191 = sand.u32 %s264, 1
          %s1192 = scalar_lea.sflag [#allocation13], %s1191
          %s1193 = sand.u32 %s264, 1
          %s1194 = smul.addr %s1193, 32
          %s1195 = scalar_lea.vmem [#allocation12], %s1194
          %1196 = dma.done %s1192, 512
        $region122: #{tpu_custom_call.1} parent=113 // pred_fallthru
          _
      $region114: #{tpu_custom_call.1} parent=5 // pred_fallthru
        _
    $region6: #{tpu_custom_call.1} parent=1 // loop_footer
      %s32 = sadd.s32 1, %s28
    $region7: #{tpu_custom_call.1} parent=1 // loop_footer_branch
      %27 = sbr.rel target = $region3
    $region8: #{tpu_custom_call.1} parent=1 // loop_exit
      _
    %1197 = vsyncpa [#allocation4], 1
    %s1198 = scalar_lea.sflag [#allocation4], 1
    %1199 = vsyncpa %s1198, 1
    %1200 = vsyncpa [#allocation7], 1
    %s1201 = scalar_lea.sflag [#allocation7], 1
    %1202 = vsyncpa %s1201, 1
    %1203 = vsyncpa [#allocation10], 1
    %1204 = vsyncpa [#allocation5], 1
    %s1205 = scalar_lea.sflag [#allocation5], 1
    %1206 = vsyncpa %s1205, 1
    %1207 = vsyncpa [#allocation13], 1
    %s1208 = scalar_lea.sflag [#allocation13], 1
    %1209 = vsyncpa %s1208, 1

</llo_original>
